<compile_context>
chip_gen: v5e
topology: v5e:2x2
jax: 0.10.0
libtpu: 0.0.40
codegen_flags: <defaults>
</compile_context>

<pallas_src>
import jax
import jax.numpy as jnp
import numpy as np
from jax.experimental import pallas as pl
from jax.experimental.pallas import tpu as pltpu

HIDDEN = 32
NUM_ACTIONS = 3
W3_PAD = 128          # last-layer weights padded to 128 cols (VMEM/MXU side only;
                      # the kernel stores just the 3 real action columns)


def _mlp_kernel(x_ref, w1_ref, b1_ref, w2_ref, b2_ref, w3_ref, b3_ref, o_ref):
    cdt = w1_ref.dtype                        # MXU operand dtype (f32 or bf16)
    x = x_ref[...].astype(cdt)                # in-kernel VPU upcast (uint8/f32 -> operand dtype)
    h1 = jnp.dot(x, w1_ref[...], preferred_element_type=jnp.float32)
    h1 = jnp.maximum(h1 + b1_ref[...], 0.0)   # bias/ReLU in f32 (VPU-safe on v5e)
    h2 = jnp.dot(h1.astype(cdt), w2_ref[...], preferred_element_type=jnp.float32)
    h2 = jnp.maximum(h2 + b2_ref[...], 0.0)
    out = jnp.dot(h2.astype(cdt), w3_ref[...], preferred_element_type=jnp.float32) + b3_ref[...]
    # Store only the 3 real action columns -> (TB, 3) output block, ~40x less writeback.
    o_ref[...] = out[:, :NUM_ACTIONS].astype(o_ref.dtype)
    # TODO(synk): for act()-style consumers, fuse argmax over the 3 Q-values here and emit
    # a (TB, 1) int32 action block to eliminate the output HBM stream entirely.


def _vmem_capacity_bytes():
    try:
        return int(pltpu.get_tpu_info().vmem_capacity_bytes)
    except Exception:
        return 64 * 1024 * 1024   # conservative fallback that fits v5e/v6e/v7x


def _choose_tb(b_pad, d, bpe_x, bpe_w, sub, vmem_budget):
    """Largest batch tile (multiple of `sub`, divisor of b_pad, <=2048) that fits the
    VMEM budget with double-buffered x/out tiles, VMEM-resident weights and f32 temps."""
    # Per-row cost: 2x x-tile buffers + 2x output buffers (lane-padded to 128) + f32
    # temporaries h1/h2/out (lane-padded).
    per_row = 2 * d * bpe_x + 2 * 128 * 4 + 4 * 128 * 4
    # Weights/biases (double-buffered by the default pipeline even though their index
    # maps are constant; counted so a big W1 can't blow v7x's 64 MiB VMEM).
    fixed = 2 * ((d * HIDDEN + HIDDEN * HIDDEN + HIDDEN * W3_PAD) * bpe_w
                 + (2 * HIDDEN + W3_PAD) * 4)
    tb_cap = max(sub, (vmem_budget - fixed) // per_row)
    tb_cap = min(tb_cap, 2048, b_pad)
    # Keep >= 2 grid steps when possible so ("parallel",) feeds both v7x TensorCores.
    if b_pad >= 2 * sub:
        tb_cap = min(tb_cap, b_pad // 2)
    # Largest multiple of `sub` that divides b_pad -> no ragged last tile, no x pad.
    tb = sub
    t = sub
    while t <= tb_cap:
        if b_pad % t == 0:
            tb = t
        t += sub
    return tb


def prepare_params(params, use_bf16=True):
    """One-time parameter prep (hoisted out of the per-step forward):
    bf16 cast of MXU weight operands (f32 accumulation stays), f32 biases as (1, out),
    last layer zero-padded to a lane-dense 128 columns."""
    w1, b1, w2, b2, w3, b3 = params
    w3 = jnp.pad(w3, ((0, 0), (0, W3_PAD - NUM_ACTIONS)))
    b3 = jnp.pad(jnp.reshape(b3, (1, -1)), ((0, 0), (0, W3_PAD - NUM_ACTIONS)))
    wdt = jnp.bfloat16 if use_bf16 else jnp.float32
    w1, w2, w3 = (w.astype(wdt) for w in (w1, w2, w3))
    b1 = jnp.reshape(b1, (1, -1)).astype(jnp.float32)
    b2 = jnp.reshape(b2, (1, -1)).astype(jnp.float32)
    b3 = b3.astype(jnp.float32)
    return (w1, b1, w2, b2, w3, b3)


def dqn_base_forward(x, kparams):
    """Forward pass. x: (B, ...) observations (f32 / bf16 / uint8). Returns (B, 3) f32."""
    w1, b1, w2, b2, w3, b3 = kparams
    B = x.shape[0]
    x2d = x.reshape(B, -1)            # Flatten; NO dtype cast here (kernel upcasts on the VPU)
    D = x2d.shape[1]

    bpe_x = jnp.dtype(x2d.dtype).itemsize
    bpe_w = jnp.dtype(w1.dtype).itemsize
    sub = max(8, 32 // bpe_x)         # sublane multiple for the x block: f32->8, bf16->16, u8->32
    b_pad = -(-B // sub) * sub
    if b_pad != B:                    # only when B itself is not a sublane multiple
        x2d = jnp.pad(x2d, ((0, b_pad - B), (0, 0)))

    capacity = _vmem_capacity_bytes()
    TB = _choose_tb(b_pad, D, bpe_x, bpe_w, sub, capacity // 2)
    n_tiles = b_pad // TB

    flops = 2 * b_pad * (D * HIDDEN + HIDDEN * HIDDEN + HIDDEN * W3_PAD)
    bytes_accessed = (
        b_pad * D * bpe_x
        + (D * HIDDEN + HIDDEN * HIDDEN + HIDDEN * W3_PAD) * bpe_w
        + (2 * HIDDEN + W3_PAD) * 4
        + b_pad * NUM_ACTIONS * 4
    )

    const = lambda i: (0, 0)   # weights/biases: one block, fetched once, VMEM-resident
    out = pl.pallas_call(
        _mlp_kernel,
        grid=(n_tiles,),
        in_specs=[
            pl.BlockSpec((TB, D), lambda i: (i, 0)),      # x tile (pipelined / double-buffered)
            pl.BlockSpec((D, HIDDEN), const),             # W1
            pl.BlockSpec((1, HIDDEN), const),             # b1
            pl.BlockSpec((HIDDEN, HIDDEN), const),        # W2
            pl.BlockSpec((1, HIDDEN), const),             # b2
            pl.BlockSpec((HIDDEN, W3_PAD), const),        # W3 (128-col padded, tiny)
            pl.BlockSpec((1, W3_PAD), const),             # b3 (padded)
        ],
        out_specs=pl.BlockSpec((TB, NUM_ACTIONS), lambda i: (i, 0)),
        out_shape=jax.ShapeDtypeStruct((b_pad, NUM_ACTIONS), jnp.float32),
        compiler_params=pltpu.CompilerParams(
            dimension_semantics=("parallel",),            # 2 TCs on v7x; no-op on v5e/v6e
            vmem_limit_bytes=int(capacity * 3 // 4),      # per-generation scoped-VMEM limit
        ),
        cost_estimate=pl.CostEstimate(
            flops=flops, transcendentals=0, bytes_accessed=bytes_accessed),
    )(x2d, w1, b1, w2, b2, w3, b3)

    return out if b_pad == B else out[:B]


def init_params(key, in_dim):
    """Deterministic init mimicking torch.nn.Linear default (uniform +/- 1/sqrt(fan_in))."""
    def linear(k, fan_in, fan_out):
        kw, kb = jax.random.split(k)
        bound = 1.0 / np.sqrt(fan_in)
        w = jax.random.uniform(kw, (fan_in, fan_out), jnp.float32, -bound, bound)
        b = jax.random.uniform(kb, (1, fan_out), jnp.float32, -bound, bound)
        return w, b

    k1, k2, k3 = jax.random.split(key, 3)
    w1, b1 = linear(k1, in_dim, HIDDEN)
    w2, b2 = linear(k2, HIDDEN, HIDDEN)
    w3, b3 = linear(k3, HIDDEN, NUM_ACTIONS)
    return (w1, b1, w2, b2, w3, b3)


def _reference(x, params):
    w1, b1, w2, b2, w3, b3 = params
    h = x.reshape(x.shape[0], -1)
    h = jnp.maximum(h @ w1 + b1, 0.0)
    h = jnp.maximum(h @ w2 + b2, 0.0)
    return h @ w3 + b3


if __name__ == "__main__":
    key = jax.random.PRNGKey(0)
    k_param, k_x, k_u8 = jax.random.split(key, 3)

    # env.get_status()[0].shape -> 1-D state vector of size D; small batch of states.
    batch, in_dim = 8, 16
    x = jax.random.normal(k_x, (batch, in_dim), jnp.float32)
    params = init_params(k_param, in_dim)
    ref = _reference(x, params)

    # f32-operand path: exact match with the pure-JAX reference.
    kp_f32 = prepare_params(params, use_bf16=False)
    q = jax.block_until_ready(dqn_base_forward(x, kp_f32))
    np.testing.assert_allclose(np.asarray(q), np.asarray(ref), rtol=1e-5, atol=1e-5)

    # bf16-operand default path (halves weight HBM reads, native MXU dtype, f32 accum).
    kp_bf16 = prepare_params(params)
    q_bf16 = jax.block_until_ready(dqn_base_forward(x, kp_bf16))
    np.testing.assert_allclose(np.asarray(q_bf16), np.asarray(ref), rtol=5e-2, atol=5e-2)

    # uint8 observation path: x is DMA'd as uint8 and upcast inside the kernel.
    xu8 = jax.random.randint(k_u8, (32, in_dim), 0, 256, jnp.int32).astype(jnp.uint8)
    ref_u8 = _reference(xu8.astype(jnp.float32), params)
    q_u8 = jax.block_until_ready(dqn_base_forward(xu8, kp_f32))
    np.testing.assert_allclose(np.asarray(q_u8), np.asarray(ref_u8), rtol=1e-3, atol=1e-3)

    print("KERNEL_OK")
</pallas_src>

<mosaic_0001>
module attributes {stable_mosaic.version = 11 : i64} {
  func.func @_mlp_kernel(%arg0: i32, %arg1: memref<8x16xf32, #tpu.memory_space<vmem>>, %arg2: memref<16x32xf32, #tpu.memory_space<vmem>>, %arg3: memref<1x32xf32, #tpu.memory_space<vmem>>, %arg4: memref<32x32xf32, #tpu.memory_space<vmem>>, %arg5: memref<1x32xf32, #tpu.memory_space<vmem>>, %arg6: memref<32x128xf32, #tpu.memory_space<vmem>>, %arg7: memref<1x128xf32, #tpu.memory_space<vmem>>, %arg8: memref<8x3xf32, #tpu.memory_space<vmem>>) attributes {dimension_semantics = [#tpu.dimension_semantics<parallel>], iteration_bounds = array<i64: 1>, scalar_prefetch = 0 : i64, scratch_operands = 0 : i64, tpu.core_type = #tpu.core_type<tc>, window_params = [{transform_indices = @transform_0, window_bounds = array<i64: 8, 16>}, {pipeline_mode = #tpu.pipeline_mode<synchronous>, transform_indices = @transform_1, window_bounds = array<i64: 16, 32>}, {pipeline_mode = #tpu.pipeline_mode<synchronous>, transform_indices = @transform_2, window_bounds = array<i64: 1, 32>}, {pipeline_mode = #tpu.pipeline_mode<synchronous>, transform_indices = @transform_3, window_bounds = array<i64: 32, 32>}, {pipeline_mode = #tpu.pipeline_mode<synchronous>, transform_indices = @transform_4, window_bounds = array<i64: 1, 32>}, {pipeline_mode = #tpu.pipeline_mode<synchronous>, transform_indices = @transform_5, window_bounds = array<i64: 32, 128>}, {pipeline_mode = #tpu.pipeline_mode<synchronous>, transform_indices = @transform_6, window_bounds = array<i64: 1, 128>}, {transform_indices = @transform_7, window_bounds = array<i64: 8, 3>}]} {
    %c0 = arith.constant 0 : index
    %c0_0 = arith.constant 0 : index
    %0 = vector.load %arg1[%c0, %c0_0] : memref<8x16xf32, #tpu.memory_space<vmem>>, vector<8x16xf32>
    %c0_1 = arith.constant 0 : index
    %c0_2 = arith.constant 0 : index
    %1 = vector.load %arg2[%c0_1, %c0_2] : memref<16x32xf32, #tpu.memory_space<vmem>>, vector<16x32xf32>
    %cst = arith.constant dense<0.000000e+00> : vector<8x32xf32>
    %2 = tpu.matmul %0, %1, %cst {dimension_numbers = #tpu.dot_dimension_numbers<[1], [0], [0], [1], [0, 0, 1, 1], [], []>} : vector<8x16xf32>, vector<16x32xf32>, vector<8x32xf32> -> vector<8x32xf32>
    %c0_3 = arith.constant 0 : index
    %c0_4 = arith.constant 0 : index
    %3 = vector.load %arg3[%c0_3, %c0_4] : memref<1x32xf32, #tpu.memory_space<vmem>>, vector<1x32xf32>
    %4 = vector.broadcast %3 : vector<1x32xf32> to vector<8x32xf32>
    %5 = arith.addf %2, %4 : vector<8x32xf32>
    %cst_5 = arith.constant 0.000000e+00 : f32
    %6 = vector.broadcast %cst_5 : f32 to vector<8x32xf32>
    %7 = arith.maximumf %5, %6 : vector<8x32xf32>
    %c0_6 = arith.constant 0 : index
    %c0_7 = arith.constant 0 : index
    %8 = vector.load %arg4[%c0_6, %c0_7] : memref<32x32xf32, #tpu.memory_space<vmem>>, vector<32x32xf32>
    %cst_8 = arith.constant dense<0.000000e+00> : vector<8x32xf32>
    %9 = tpu.matmul %7, %8, %cst_8 {dimension_numbers = #tpu.dot_dimension_numbers<[1], [0], [0], [1], [0, 0, 1, 1], [], []>} : vector<8x32xf32>, vector<32x32xf32>, vector<8x32xf32> -> vector<8x32xf32>
    %c0_9 = arith.constant 0 : index
    %c0_10 = arith.constant 0 : index
    %10 = vector.load %arg5[%c0_9, %c0_10] : memref<1x32xf32, #tpu.memory_space<vmem>>, vector<1x32xf32>
    %11 = vector.broadcast %10 : vector<1x32xf32> to vector<8x32xf32>
    %12 = arith.addf %9, %11 : vector<8x32xf32>
    %cst_11 = arith.constant 0.000000e+00 : f32
    %13 = vector.broadcast %cst_11 : f32 to vector<8x32xf32>
    %14 = arith.maximumf %12, %13 : vector<8x32xf32>
    %c0_12 = arith.constant 0 : index
    %c0_13 = arith.constant 0 : index
    %15 = vector.load %arg6[%c0_12, %c0_13] : memref<32x128xf32, #tpu.memory_space<vmem>>, vector<32x128xf32>
    %cst_14 = arith.constant dense<0.000000e+00> : vector<8x128xf32>
    %16 = tpu.matmul %14, %15, %cst_14 {dimension_numbers = #tpu.dot_dimension_numbers<[1], [0], [0], [1], [0, 0, 1, 1], [], []>} : vector<8x32xf32>, vector<32x128xf32>, vector<8x128xf32> -> vector<8x128xf32>
    %c0_15 = arith.constant 0 : index
    %c0_16 = arith.constant 0 : index
    %17 = vector.load %arg7[%c0_15, %c0_16] : memref<1x128xf32, #tpu.memory_space<vmem>>, vector<1x128xf32>
    %18 = vector.broadcast %17 : vector<1x128xf32> to vector<8x128xf32>
    %19 = arith.addf %16, %18 : vector<8x128xf32>
    %20 = vector.extract_strided_slice %19 {offsets = [0, 0], sizes = [8, 3], strides = [1, 1]} : vector<8x128xf32> to vector<8x3xf32>
    %c0_17 = arith.constant 0 : index
    %c0_18 = arith.constant 0 : index
    %21 = vector.load %arg8[%c0_17, %c0_18] : memref<8x3xf32, #tpu.memory_space<vmem>>, vector<8x3xf32>
    tpu.vector_store %arg8[%c0_17, %c0_18], %20 {strides = array<i32>} : memref<8x3xf32, #tpu.memory_space<vmem>>, vector<8x3xf32>,
    return
  }
  func.func @transform_0(%arg0: i32) -> (i32, i32) {
    %c0_i32 = arith.constant 0 : i32
    %c0_i32_0 = arith.constant 0 : i32
    return %arg0, %c0_i32 : i32, i32
  }
  func.func @transform_1(%arg0: i32) -> (i32, i32) {
    %c0_i32 = arith.constant 0 : i32
    %c0_i32_0 = arith.constant 0 : i32
    %c0_i32_1 = arith.constant 0 : i32
    return %c0_i32, %c0_i32_0 : i32, i32
  }
  func.func @transform_2(%arg0: i32) -> (i32, i32) {
    %c0_i32 = arith.constant 0 : i32
    %c0_i32_0 = arith.constant 0 : i32
    %c0_i32_1 = arith.constant 0 : i32
    return %c0_i32, %c0_i32_0 : i32, i32
  }
  func.func @transform_3(%arg0: i32) -> (i32, i32) {
    %c0_i32 = arith.constant 0 : i32
    %c0_i32_0 = arith.constant 0 : i32
    %c0_i32_1 = arith.constant 0 : i32
    return %c0_i32, %c0_i32_0 : i32, i32
  }
  func.func @transform_4(%arg0: i32) -> (i32, i32) {
    %c0_i32 = arith.constant 0 : i32
    %c0_i32_0 = arith.constant 0 : i32
    %c0_i32_1 = arith.constant 0 : i32
    return %c0_i32, %c0_i32_0 : i32, i32
  }
  func.func @transform_5(%arg0: i32) -> (i32, i32) {
    %c0_i32 = arith.constant 0 : i32
    %c0_i32_0 = arith.constant 0 : i32
    %c0_i32_1 = arith.constant 0 : i32
    return %c0_i32, %c0_i32_0 : i32, i32
  }
  func.func @transform_6(%arg0: i32) -> (i32, i32) {
    %c0_i32 = arith.constant 0 : i32
    %c0_i32_0 = arith.constant 0 : i32
    %c0_i32_1 = arith.constant 0 : i32
    return %c0_i32, %c0_i32_0 : i32, i32
  }
  func.func @transform_7(%arg0: i32) -> (i32, i32) {
    %c0_i32 = arith.constant 0 : i32
    %c0_i32_0 = arith.constant 0 : i32
    return %arg0, %c0_i32 : i32, i32
  }
}

</mosaic_0001>

<llo_original>
// kernel: tpu_custom_call.1
$region0: #{tpu_custom_call.1}
  #allocation0 [shape = 'u32[]', space=smem, size = 0x4, offset = 0x4, fixed_abs, tag = 'smem constant byte address 0x4 - core index']
  #allocation1 [shape = 'u32[72,128]{1,0:T(1,128)}', space=vmem, size = 0x9000, scoped, tag = 'internal scratch']
  %s0 = inlined_call_operand.hbm [shape: f32[8,16], index: 0, kind: input, shape index: {}]
  %s1 = inlined_call_operand.hbm [shape: f32[16,32], index: 1, kind: input, shape index: {}]
  %s2 = inlined_call_operand.vmem [shape: f32[1,32], index: 2, kind: input, shape index: {}]
  %s3 = inlined_call_operand.hbm [shape: f32[32,32], index: 3, kind: input, shape index: {}]
  %s4 = inlined_call_operand.vmem [shape: f32[1,32], index: 4, kind: input, shape index: {}]
  %s5 = inlined_call_operand.hbm [shape: f32[32,128], index: 5, kind: input, shape index: {}]
  %s6 = inlined_call_operand.vmem [shape: f32[1,128], index: 6, kind: input, shape index: {}]
  %s7 = inlined_call_operand.vmem [shape: f32[8,3], index: 7, kind: output, shape index: {}]
  %s8 = sld [smem:[#allocation0]]
  $region54: #{tpu_custom_call.1} parent=0
    _
  %s10 = ssub.s32 1, %s8
  %s11 = scalar_select 0, %s10, %s8
  $region1: #{tpu_custom_call.1} parent=0
    #allocation2 [shape = 'u8[4096]{0}', space=vmem, size = 0x1000, scoped, tag = 'input window, operand 0, single buffered']
    #allocation3 [shape = 's32[1]{0}', space=sflag, size = 0x4, scoped, tag = 'scoped memory for tpu_custom_call.1']
    #allocation4 [shape = 'u8[8192]{0}', space=vmem, size = 0x2000, scoped, tag = 'input window, operand 1, single buffered']
    #allocation5 [shape = 's32[1]{0}', space=sflag, size = 0x4, scoped, tag = 'scoped memory for tpu_custom_call.1']
    #allocation6 [shape = 'u8[16384]{0}', space=vmem, size = 0x4000, scoped, tag = 'input window, operand 3, single buffered']
    #allocation7 [shape = 'u8[16384]{0}', space=vmem, size = 0x4000, scoped, tag = 'input window, operand 5, single buffered']
    #allocation8 [shape = 's32[1]{0}', space=sflag, size = 0x4, scoped, tag = 'scoped memory for tpu_custom_call.1']
    %12 = vsyncpa [#allocation3], 0
    %13 = vsyncpa [#allocation5], 0
    %14 = vsyncpa [#allocation8], 0
    // Predicated region
    $region2: #{tpu_custom_call.1} parent=1 // pred_check
      _
    $region3: #{tpu_custom_call.1} parent=1 // pred_check_branch
      %16 = sbr.rel (0) target = $region5
    $region4: #{tpu_custom_call.1} parent=1 // pred_region
      %18 = vsyncadd [#allocation3], 0
      %s20 = sshll.u32 %s0, 4
      %s21 = int_to_ptr.hbm [resolvable:$true] %s20
      %s22 = sshll.u32 [#allocation2], 4
      %s23 = int_to_ptr.vmem [resolvable:$true] %s22
      %25 = dma.hbm_to_vmem [thread:$0]  %s21, 128, %s23, [#allocation3]
    $region5: #{tpu_custom_call.1} parent=1 // pred_fallthru
      _
    // Predicated region
    $region6: #{tpu_custom_call.1} parent=1 // pred_check
      _
    $region7: #{tpu_custom_call.1} parent=1 // pred_check_branch
      %27 = sbr.rel (0) target = $region9
    $region8: #{tpu_custom_call.1} parent=1 // pred_region
      %29 = vsyncadd [#allocation5], 0
      %s30 = sshll.u32 %s1, 4
      %s31 = int_to_ptr.hbm [resolvable:$true] %s30
      %s32 = sshll.u32 [#allocation4], 4
      %s33 = int_to_ptr.vmem [resolvable:$true] %s32
      %38 = dma.hbm_to_vmem [thread:$0]  %s31, 256, %s33, [#allocation5], 128, 128, 8
    $region9: #{tpu_custom_call.1} parent=1 // pred_fallthru
      _
    // Predicated region
    $region10: #{tpu_custom_call.1} parent=1 // pred_check
      _
    $region11: #{tpu_custom_call.1} parent=1 // pred_check_branch
      %40 = sbr.rel (0) target = $region13
    $region12: #{tpu_custom_call.1} parent=1 // pred_region
      _
    $region13: #{tpu_custom_call.1} parent=1 // pred_fallthru
      _
    // Predicated region
    $region14: #{tpu_custom_call.1} parent=1 // pred_check
      _
    $region15: #{tpu_custom_call.1} parent=1 // pred_check_branch
      %42 = sbr.rel (0) target = $region17
    $region16: #{tpu_custom_call.1} parent=1 // pred_region
      %44 = vsyncadd [#allocation5], 0
      %s45 = sshll.u32 %s3, 4
      %s46 = int_to_ptr.hbm [resolvable:$true] %s45
      %s47 = sshll.u32 [#allocation6], 4
      %s48 = int_to_ptr.vmem [resolvable:$true] %s47
      %53 = dma.hbm_to_vmem [thread:$0]  %s46, 512, %s48, [#allocation5], 128, 128, 8
    $region17: #{tpu_custom_call.1} parent=1 // pred_fallthru
      _
    // Predicated region
    $region18: #{tpu_custom_call.1} parent=1 // pred_check
      _
    $region19: #{tpu_custom_call.1} parent=1 // pred_check_branch
      %55 = sbr.rel (0) target = $region21
    $region20: #{tpu_custom_call.1} parent=1 // pred_region
      _
    $region21: #{tpu_custom_call.1} parent=1 // pred_fallthru
      _
    // Predicated region
    $region22: #{tpu_custom_call.1} parent=1 // pred_check
      _
    $region23: #{tpu_custom_call.1} parent=1 // pred_check_branch
      %57 = sbr.rel (0) target = $region25
    $region24: #{tpu_custom_call.1} parent=1 // pred_region
      %59 = vsyncadd [#allocation8], 0
      %s60 = sshll.u32 %s5, 4
      %s61 = int_to_ptr.hbm [resolvable:$true] %s60
      %s62 = sshll.u32 [#allocation7], 4
      %s63 = int_to_ptr.vmem [resolvable:$true] %s62
      %68 = dma.hbm_to_vmem [thread:$0]  %s61, 512, %s63, [#allocation8], 128, 128, 8
    $region25: #{tpu_custom_call.1} parent=1 // pred_fallthru
      _
    // Predicated region
    $region26: #{tpu_custom_call.1} parent=1 // pred_check
      _
    $region27: #{tpu_custom_call.1} parent=1 // pred_check_branch
      %70 = sbr.rel (0) target = $region29
    $region28: #{tpu_custom_call.1} parent=1 // pred_region
      _
    $region29: #{tpu_custom_call.1} parent=1 // pred_fallthru
      _
    // Predicated region
    $region30: #{tpu_custom_call.1} parent=1 // pred_check
      _
    $region31: #{tpu_custom_call.1} parent=1 // pred_check_branch
      %72 = sbr.rel (0) target = $region33
    $region32: #{tpu_custom_call.1} parent=1 // pred_region
      %74 = dma.done [#allocation3], 128
    $region33: #{tpu_custom_call.1} parent=1 // pred_fallthru
      _
    // Predicated region
    $region34: #{tpu_custom_call.1} parent=1 // pred_check
      _
    $region35: #{tpu_custom_call.1} parent=1 // pred_check_branch
      %76 = sbr.rel (0) target = $region37
    $region36: #{tpu_custom_call.1} parent=1 // pred_region
      %78 = dma.done [#allocation5], 256
    $region37: #{tpu_custom_call.1} parent=1 // pred_fallthru
      _
    // Predicated region
    $region38: #{tpu_custom_call.1} parent=1 // pred_check
      _
    $region39: #{tpu_custom_call.1} parent=1 // pred_check_branch
      %80 = sbr.rel (0) target = $region41
    $region40: #{tpu_custom_call.1} parent=1 // pred_region
      %82 = dma.done [#allocation5], 512
    $region41: #{tpu_custom_call.1} parent=1 // pred_fallthru
      _
    // Predicated region
    $region42: #{tpu_custom_call.1} parent=1 // pred_check
      _
    $region43: #{tpu_custom_call.1} parent=1 // pred_check_branch
      %84 = sbr.rel (0) target = $region45
    $region44: #{tpu_custom_call.1} parent=1 // pred_region
      %86 = dma.done [#allocation8], 512
    $region45: #{tpu_custom_call.1} parent=1 // pred_fallthru
      _
    %v87 = vld [vmem:[#allocation2] sm:$0xff]
    %v88 = vld [vmem:[#allocation4] sm:$0xff]
    %v89 = vld [vmem:[#allocation4 + $0x8] sm:$0xff]
    %v90 = vld [vmem:[%s2] sm:$0x1]
    %v92 = vperm.slane %v90, 0
    %vm94 = vcmask 130048
    %v96 = vsel %vm94, %v87, 0
    %98 = vmatpush.msra.mxu0 0.0
    %99 = vmatpush.msra.mxu0 0.0
    %100 = vmatpush.msra.mxu0 0.0
    %101 = vmatpush.msra.mxu0 0.0
    %102 = vmatpush.msra.mxu0 0.0
    %103 = vmatpush.msra.mxu0 0.0
    %104 = vmatpush.msra.mxu0 0.0
    %105 = vmatpush.msra.mxu0 0.0
    %106 = vmatpush.msra.mxu0 0.0
    %107 = vmatpush.msra.mxu0 0.0
    %108 = vmatpush.msra.mxu0 0.0
    %109 = vmatpush.msra.mxu0 0.0
    %110 = vmatpush.msra.mxu0 0.0
    %111 = vmatpush.msra.mxu0 0.0
    %112 = vmatpush.msra.mxu0 %v89
    %113 = vmatpush.msra.mxu0 %v88
    %114 = vmatmul.f32.gmra.mxu0 %v96
    %v115 = vpop.f32.mrf.mxu0
    %v116 = vadd.f32 %v92, %v115
    %117 = vdwg.mxu0
    %v118 = vmax.f32 %v116, 0.0
    %v119 = vld [vmem:[#allocation6] sm:$0xff]
    %v120 = vld [vmem:[#allocation6 + $0x8] sm:$0xff]
    %v121 = vld [vmem:[#allocation6 + $0x10] sm:$0xff]
    %v122 = vld [vmem:[#allocation6 + $0x18] sm:$0xff]
    %v123 = vld [vmem:[%s4] sm:$0x1]
    %v125 = vperm.slane %v123, 0
    %vm127 = vcmask 261120
    %v129 = vsel %vm127, %v118, 0
    %131 = vmatpush.msra.mxu0 0.0
    %132 = vmatpush.msra.mxu0 0.0
    %133 = vmatpush.msra.mxu0 0.0
    %134 = vmatpush.msra.mxu0 0.0
    %135 = vmatpush.msra.mxu0 0.0
    %136 = vmatpush.msra.mxu0 0.0
    %137 = vmatpush.msra.mxu0 0.0
    %138 = vmatpush.msra.mxu0 0.0
    %139 = vmatpush.msra.mxu0 0.0
    %140 = vmatpush.msra.mxu0 0.0
    %141 = vmatpush.msra.mxu0 0.0
    %142 = vmatpush.msra.mxu0 0.0
    %143 = vmatpush.msra.mxu0 %v122
    %144 = vmatpush.msra.mxu0 %v121
    %145 = vmatpush.msra.mxu0 %v120
    %146 = vmatpush.msra.mxu0 %v119
    %147 = vmatmul.f32.gmra.mxu0 %v129
    %v148 = vpop.f32.mrf.mxu0
    %v149 = vadd.f32 %v125, %v148
    %150 = vdwg.mxu0
    %v151 = vmax.f32 %v149, 0.0
    %v152 = vld [vmem:[#allocation7] sm:$0xff]
    %v153 = vld [vmem:[#allocation7 + $0x8] sm:$0xff]
    %v154 = vld [vmem:[#allocation7 + $0x10] sm:$0xff]
    %v155 = vld [vmem:[#allocation7 + $0x18] sm:$0xff]
    %v156 = vld [vmem:[%s6] sm:$0x1]
    %v158 = vperm.slane %v156, 0
    %v161 = vsel %vm127, %v151, 0
    %163 = vmatpush.msra.mxu0 0.0
    %164 = vmatpush.msra.mxu0 0.0
    %165 = vmatpush.msra.mxu0 0.0
    %166 = vmatpush.msra.mxu0 0.0
    %167 = vmatpush.msra.mxu0 0.0
    %168 = vmatpush.msra.mxu0 0.0
    %169 = vmatpush.msra.mxu0 0.0
    %170 = vmatpush.msra.mxu0 0.0
    %171 = vmatpush.msra.mxu0 0.0
    %172 = vmatpush.msra.mxu0 0.0
    %173 = vmatpush.msra.mxu0 0.0
    %174 = vmatpush.msra.mxu0 0.0
    %175 = vmatpush.msra.mxu0 %v155
    %176 = vmatpush.msra.mxu0 %v154
    %177 = vmatpush.msra.mxu0 %v153
    %178 = vmatpush.msra.mxu0 %v152
    %179 = vmatmul.f32.gmra.mxu0 %v161
    %v180 = vpop.f32.mrf.mxu0
    %v181 = vadd.f32 %v158, %v180
    %182 = vdwg.mxu0
    %vm183 = vcmask 23552
    %184 = vst.msk [vmem:[%s7] sm:$0xff] %vm183, %v181
    // Predicated region
    $region46: #{tpu_custom_call.1} parent=1 // pred_check
      _
    $region47: #{tpu_custom_call.1} parent=1 // pred_check_branch
      %186 = sbr.rel (0) target = $region49
    $region48: #{tpu_custom_call.1} parent=1 // pred_region
      _
    $region49: #{tpu_custom_call.1} parent=1 // pred_fallthru
      _
    // Predicated region
    $region50: #{tpu_custom_call.1} parent=1 // pred_check
      _
    $region51: #{tpu_custom_call.1} parent=1 // pred_check_branch
      %188 = sbr.rel (0) target = $region53
    $region52: #{tpu_custom_call.1} parent=1 // pred_region
      _
    $region53: #{tpu_custom_call.1} parent=1 // pred_fallthru
      _
    %189 = vsyncpa [#allocation3], 1
    %190 = vsyncpa [#allocation5], 1
    %191 = vsyncpa [#allocation8], 1

</llo_original>
